<compile_context>
chip_gen: v7x
topology: tpu7x:2x2x1
jax: 0.10.0
libtpu: 0.0.40
codegen_flags: <defaults>
</compile_context>

<pallas_src>
import functools

import jax
import jax.numpy as jnp
from jax.experimental import pallas as pl
from jax.experimental.pallas import tpu as pltpu

EPS = 1e-5


def _make_mlp_kernel(num_layers, batch):
    """Kernel for one BN batch (one grid step).

    Refs: x (1,B,D), w_packed (L,D,D), vecs (2*(L-1)+1, D), out (1,B,D)
      vecs rows: [0.5*gamma_0, 0.5*beta_0, ..., folded final bias]
    """
    inv_b = 1.0 / float(batch)

    def kernel(x_ref, w_ref, vecs_ref, o_ref):
        vecs = vecs_ref[...]                       # single tiny packed tile
        h = x_ref[0].astype(jnp.float32)           # (B, D)

        # Hidden layers: Linear (bias dropped; BN-cancelled) -> BN -> tanh.
        for i in range(num_layers - 1):
            z = jnp.dot(h, w_ref[i], preferred_element_type=jnp.float32)

            # One-pass full-batch BN stats (biased variance), clamped >= 0.
            s = jnp.sum(z, axis=0, keepdims=True)
            ss = jnp.sum(z * z, axis=0, keepdims=True)
            mean = s * inv_b
            var = jnp.maximum(ss * inv_b - mean * mean, 0.0)

            gamma_h = vecs[2 * i:2 * i + 1, :]     # already 0.5*gamma (padded w/ 0)
            beta_h = vecs[2 * i + 1:2 * i + 2, :]  # already 0.5*beta
            scale = gamma_h * jax.lax.rsqrt(var + EPS)
            shift = beta_h - mean * scale
            # sigmoid folded away: next layer's weights already carry the 0.5,
            # the +0.5 constant is absorbed by the next BN / the final bias.
            h = jnp.tanh(z * scale + shift)

        # Final Linear; weight and bias already carry the 0.5 and /32 folds.
        b_last = vecs[-1:, :]
        out = jnp.dot(h, w_ref[num_layers - 1],
                      preferred_element_type=jnp.float32) + b_last
        o_ref[0] = out.astype(o_ref.dtype)

    return kernel


@functools.partial(jax.jit, static_argnames=("layer_sizes",))
def hamiltonian_nn_forward(x, w_packed, vecs, *, layer_sizes):
    """x: (B, in) or (G, B, in) f32.  w_packed/vecs from pack_params()."""
    layer_sizes = tuple(layer_sizes)
    num_layers = len(layer_sizes) - 1
    D = max(layer_sizes)
    in_dim, out_dim = layer_sizes[0], layer_sizes[-1]

    squeeze_group = (x.ndim == 2)
    if squeeze_group:
        x = x[None]                                  # (1, B, in)
    G, B, _ = x.shape
    x = jnp.pad(x, ((0, 0), (0, 0), (0, D - in_dim)))   # lane-pad input

    kernel = _make_mlp_kernel(num_layers, B)
    n_rows = vecs.shape[0]

    out = pl.pallas_call(
        kernel,
        grid=(G,),
        out_shape=jax.ShapeDtypeStruct((G, B, D), jnp.float32),
        in_specs=[
            pl.BlockSpec((1, B, D), lambda g: (g, 0, 0)),            # x tile
            pl.BlockSpec((num_layers, D, D), lambda g: (0, 0, 0)),   # weights (DMA'd once)
            pl.BlockSpec((n_rows, D), lambda g: (0, 0)),             # packed vectors
        ],
        out_specs=pl.BlockSpec((1, B, D), lambda g: (g, 0, 0)),
        compiler_params=pltpu.CompilerParams(
            dimension_semantics=("parallel",)),
    )(x, w_packed, vecs)

    out = out[..., :out_dim]
    if squeeze_group:
        out = out[0]
    return out


def pack_params(params, layer_sizes):
    """One-time host-side transform of the raw parameters.

    - drops hidden-layer biases (exactly cancelled by training-mode BN),
    - halves gamma/beta (exact) so the kernel emits tanh directly,
    - folds the sigmoid's 0.5 output scale into the next layer's weights and
      (for the last layer) 0.5*colsum(W_last) into the final bias,
    - folds the final /32 into the last layer's weight and bias (exact),
    - packs all weights into one zero-padded (L, D, D) array and all row
      vectors into one (n_rows, D) array -> 2 DMAs total for parameters.
    """
    num_layers = len(layer_sizes) - 1
    D = max(layer_sizes)

    w_folded = []
    for i in range(num_layers):
        w = params[f"w{i}"]                          # (in, out)
        if i > 0:
            w = w * 0.5                              # absorb previous sigmoid's 0.5
        if i == num_layers - 1:
            w = w * (1.0 / 32.0)
        w_folded.append(w)

    b_last = params[f"b{num_layers - 1}"]
    if num_layers > 1:
        b_last = b_last + 0.5 * jnp.sum(params[f"w{num_layers - 1}"], axis=0)
    b_last = b_last * (1.0 / 32.0)

    w_packed = jnp.zeros((num_layers, D, D), jnp.float32)
    for i, w in enumerate(w_folded):
        w_packed = w_packed.at[i, :w.shape[0], :w.shape[1]].set(w)

    def pad_row(v):
        return jnp.pad(v, (0, D - v.shape[0]))

    rows = []
    for i in range(num_layers - 1):
        rows.append(pad_row(0.5 * params[f"gamma{i}"]))
        rows.append(pad_row(0.5 * params[f"beta{i}"]))
    rows.append(pad_row(b_last))
    vecs = jnp.stack(rows, axis=0)                   # (2*(L-1)+1, D)

    return w_packed, vecs


def init_params(key, layer_sizes):
    """Deterministic synthetic parameter init (PyTorch-like uniform fan-in)."""
    params = {}
    num_layers = len(layer_sizes) - 1
    for i in range(num_layers):
        fan_in, fan_out = layer_sizes[i], layer_sizes[i + 1]
        key, kw, kb = jax.random.split(key, 3)
        bound = 1.0 / jnp.sqrt(jnp.float32(fan_in))
        # stored transposed: (in, out)
        params[f"w{i}"] = jax.random.uniform(
            kw, (fan_in, fan_out), jnp.float32, -bound, bound)
        params[f"b{i}"] = jax.random.uniform(
            kb, (fan_out,), jnp.float32, -bound, bound)
    for i in range(num_layers - 1):
        params[f"gamma{i}"] = jnp.ones((layer_sizes[i + 1],), jnp.float32)
        params[f"beta{i}"] = jnp.zeros((layer_sizes[i + 1],), jnp.float32)
    return params


def _reference_forward(x, params, layer_sizes):
    """Pure-JAX reference of the PyTorch forward (training-mode BatchNorm1d)."""
    num_layers = len(layer_sizes) - 1
    h = x
    for i in range(num_layers - 1):
        h = h @ params[f"w{i}"] + params[f"b{i}"]
        mean = jnp.mean(h, axis=0, keepdims=True)
        var = jnp.mean((h - mean) ** 2, axis=0, keepdims=True)
        h = (h - mean) / jnp.sqrt(var + EPS) * params[f"gamma{i}"] + params[f"beta{i}"]
        h = jax.nn.sigmoid(h)
    h = h @ params[f"w{num_layers - 1}"] + params[f"b{num_layers - 1}"]
    return h / 32.0


if __name__ == "__main__":
    # Spring-mass Hamiltonian: input (q, p) -> scalar energy.
    layer_sizes = (2, 32, 32, 1)
    batch = 8

    key = jax.random.PRNGKey(0)
    key, kx, kxm = jax.random.split(key, 3)
    x = jax.random.normal(kx, (batch, layer_sizes[0]), jnp.float32)
    params = init_params(key, layer_sizes)
    w_packed, vecs = pack_params(params, layer_sizes)

    # Single BN batch (exact semantics of the PyTorch module forward).
    out = hamiltonian_nn_forward(x, w_packed, vecs, layer_sizes=layer_sizes)
    out = jax.block_until_ready(out)
    ref = _reference_forward(x, params, layer_sizes)
    assert out.shape == (batch, layer_sizes[-1])
    # Relaxed vs 1e-5: one-pass variance + tanh-form sigmoid + weight/bias
    # folding change rounding order by a few ulps per layer.
    assert jnp.allclose(out, ref, atol=1e-4, rtol=1e-4), "mismatch vs reference"

    # Multi-group (ODE-integrator style) path: each grid step is one BN batch.
    groups = 4
    x_multi = jax.random.normal(kxm, (groups, batch, layer_sizes[0]), jnp.float32)
    out_multi = hamiltonian_nn_forward(x_multi, w_packed, vecs,
                                       layer_sizes=layer_sizes)
    out_multi = jax.block_until_ready(out_multi)
    ref_multi = jax.vmap(
        lambda xg: _reference_forward(xg, params, layer_sizes))(x_multi)
    assert out_multi.shape == (groups, batch, layer_sizes[-1])
    assert jnp.allclose(out_multi, ref_multi, atol=1e-4, rtol=1e-4), \
        "mismatch vs reference (multi-group)"

    print("KERNEL_OK")
</pallas_src>

<mosaic_0001>
module attributes {stable_mosaic.version = 11 : i64} {
  func.func @kernel(%arg0: i32, %arg1: memref<1x8x32xf32, #tpu.memory_space<vmem>>, %arg2: memref<3x32x32xf32, #tpu.memory_space<vmem>>, %arg3: memref<5x32xf32, #tpu.memory_space<vmem>>, %arg4: memref<1x8x32xf32, #tpu.memory_space<vmem>>) attributes {dimension_semantics = [#tpu.dimension_semantics<parallel>], iteration_bounds = array<i64: 1>, scalar_prefetch = 0 : i64, scratch_operands = 0 : i64, tpu.core_type = #tpu.core_type<tc>, window_params = [{transform_indices = @transform_0, window_bounds = array<i64: 1, 8, 32>}, {pipeline_mode = #tpu.pipeline_mode<synchronous>, transform_indices = @transform_1, window_bounds = array<i64: 3, 32, 32>}, {pipeline_mode = #tpu.pipeline_mode<synchronous>, transform_indices = @transform_2, window_bounds = array<i64: 5, 32>}, {transform_indices = @transform_3, window_bounds = array<i64: 1, 8, 32>}]} {
    %c0 = arith.constant 0 : index
    %c0_0 = arith.constant 0 : index
    %0 = vector.load %arg3[%c0, %c0_0] : memref<5x32xf32, #tpu.memory_space<vmem>>, vector<5x32xf32>
    %c0_1 = arith.constant 0 : index
    %c0_2 = arith.constant 0 : index
    %c0_3 = arith.constant 0 : index
    %1 = vector.load %arg1[%c0_1, %c0_2, %c0_3] : memref<1x8x32xf32, #tpu.memory_space<vmem>>, vector<1x8x32xf32>
    %2 = vector.shape_cast %1 : vector<1x8x32xf32> to vector<8x32xf32>
    %c0_4 = arith.constant 0 : index
    %c0_5 = arith.constant 0 : index
    %c0_6 = arith.constant 0 : index
    %3 = vector.load %arg2[%c0_4, %c0_5, %c0_6] : memref<3x32x32xf32, #tpu.memory_space<vmem>>, vector<1x32x32xf32>
    %4 = vector.shape_cast %3 : vector<1x32x32xf32> to vector<32x32xf32>
    %cst = arith.constant dense<0.000000e+00> : vector<8x32xf32>
    %5 = tpu.matmul %2, %4, %cst {dimension_numbers = #tpu.dot_dimension_numbers<[1], [0], [0], [1], [0, 0, 1, 1], [], []>} : vector<8x32xf32>, vector<32x32xf32>, vector<8x32xf32> -> vector<8x32xf32>
    %cst_7 = arith.constant dense<0.000000e+00> : vector<32xf32>
    %6 = vector.multi_reduction <add>, %5, %cst_7 [0] : vector<8x32xf32> to vector<32xf32>
    %7 = vector.shape_cast %6 : vector<32xf32> to vector<1x32xf32>
    %8 = arith.mulf %5, %5 : vector<8x32xf32>
    %cst_8 = arith.constant dense<0.000000e+00> : vector<32xf32>
    %9 = vector.multi_reduction <add>, %8, %cst_8 [0] : vector<8x32xf32> to vector<32xf32>
    %10 = vector.shape_cast %9 : vector<32xf32> to vector<1x32xf32>
    %cst_9 = arith.constant 1.250000e-01 : f32
    %11 = vector.broadcast %cst_9 : f32 to vector<1x32xf32>
    %12 = arith.mulf %7, %11 : vector<1x32xf32>
    %cst_10 = arith.constant 1.250000e-01 : f32
    %13 = vector.broadcast %cst_10 : f32 to vector<1x32xf32>
    %14 = arith.mulf %10, %13 : vector<1x32xf32>
    %15 = arith.mulf %12, %12 : vector<1x32xf32>
    %16 = arith.subf %14, %15 : vector<1x32xf32>
    %cst_11 = arith.constant 0.000000e+00 : f32
    %17 = vector.broadcast %cst_11 : f32 to vector<1x32xf32>
    %18 = arith.maximumf %16, %17 : vector<1x32xf32>
    %19 = vector.extract_strided_slice %0 {offsets = [0, 0], sizes = [1, 32], strides = [1, 1]} : vector<5x32xf32> to vector<1x32xf32>
    %20 = vector.extract_strided_slice %0 {offsets = [1, 0], sizes = [1, 32], strides = [1, 1]} : vector<5x32xf32> to vector<1x32xf32>
    %cst_12 = arith.constant 9.99999974E-6 : f32
    %21 = vector.broadcast %cst_12 : f32 to vector<1x32xf32>
    %22 = arith.addf %18, %21 : vector<1x32xf32>
    %23 = math.rsqrt %22 : vector<1x32xf32>
    %24 = arith.mulf %19, %23 : vector<1x32xf32>
    %25 = arith.mulf %12, %24 : vector<1x32xf32>
    %26 = arith.subf %20, %25 : vector<1x32xf32>
    %27 = vector.broadcast %24 : vector<1x32xf32> to vector<8x32xf32>
    %28 = arith.mulf %5, %27 : vector<8x32xf32>
    %29 = vector.broadcast %26 : vector<1x32xf32> to vector<8x32xf32>
    %30 = arith.addf %28, %29 : vector<8x32xf32>
    %31 = math.tanh %30 : vector<8x32xf32>
    %c1 = arith.constant 1 : index
    %c0_13 = arith.constant 0 : index
    %c0_14 = arith.constant 0 : index
    %32 = vector.load %arg2[%c1, %c0_13, %c0_14] : memref<3x32x32xf32, #tpu.memory_space<vmem>>, vector<1x32x32xf32>
    %33 = vector.shape_cast %32 : vector<1x32x32xf32> to vector<32x32xf32>
    %cst_15 = arith.constant dense<0.000000e+00> : vector<8x32xf32>
    %34 = tpu.matmul %31, %33, %cst_15 {dimension_numbers = #tpu.dot_dimension_numbers<[1], [0], [0], [1], [0, 0, 1, 1], [], []>} : vector<8x32xf32>, vector<32x32xf32>, vector<8x32xf32> -> vector<8x32xf32>
    %cst_16 = arith.constant dense<0.000000e+00> : vector<32xf32>
    %35 = vector.multi_reduction <add>, %34, %cst_16 [0] : vector<8x32xf32> to vector<32xf32>
    %36 = vector.shape_cast %35 : vector<32xf32> to vector<1x32xf32>
    %37 = arith.mulf %34, %34 : vector<8x32xf32>
    %cst_17 = arith.constant dense<0.000000e+00> : vector<32xf32>
    %38 = vector.multi_reduction <add>, %37, %cst_17 [0] : vector<8x32xf32> to vector<32xf32>
    %39 = vector.shape_cast %38 : vector<32xf32> to vector<1x32xf32>
    %cst_18 = arith.constant 1.250000e-01 : f32
    %40 = vector.broadcast %cst_18 : f32 to vector<1x32xf32>
    %41 = arith.mulf %36, %40 : vector<1x32xf32>
    %cst_19 = arith.constant 1.250000e-01 : f32
    %42 = vector.broadcast %cst_19 : f32 to vector<1x32xf32>
    %43 = arith.mulf %39, %42 : vector<1x32xf32>
    %44 = arith.mulf %41, %41 : vector<1x32xf32>
    %45 = arith.subf %43, %44 : vector<1x32xf32>
    %cst_20 = arith.constant 0.000000e+00 : f32
    %46 = vector.broadcast %cst_20 : f32 to vector<1x32xf32>
    %47 = arith.maximumf %45, %46 : vector<1x32xf32>
    %48 = vector.extract_strided_slice %0 {offsets = [2, 0], sizes = [1, 32], strides = [1, 1]} : vector<5x32xf32> to vector<1x32xf32>
    %49 = vector.extract_strided_slice %0 {offsets = [3, 0], sizes = [1, 32], strides = [1, 1]} : vector<5x32xf32> to vector<1x32xf32>
    %cst_21 = arith.constant 9.99999974E-6 : f32
    %50 = vector.broadcast %cst_21 : f32 to vector<1x32xf32>
    %51 = arith.addf %47, %50 : vector<1x32xf32>
    %52 = math.rsqrt %51 : vector<1x32xf32>
    %53 = arith.mulf %48, %52 : vector<1x32xf32>
    %54 = arith.mulf %41, %53 : vector<1x32xf32>
    %55 = arith.subf %49, %54 : vector<1x32xf32>
    %56 = vector.broadcast %53 : vector<1x32xf32> to vector<8x32xf32>
    %57 = arith.mulf %34, %56 : vector<8x32xf32>
    %58 = vector.broadcast %55 : vector<1x32xf32> to vector<8x32xf32>
    %59 = arith.addf %57, %58 : vector<8x32xf32>
    %60 = math.tanh %59 : vector<8x32xf32>
    %61 = vector.extract_strided_slice %0 {offsets = [4, 0], sizes = [1, 32], strides = [1, 1]} : vector<5x32xf32> to vector<1x32xf32>
    %c2 = arith.constant 2 : index
    %c0_22 = arith.constant 0 : index
    %c0_23 = arith.constant 0 : index
    %62 = vector.load %arg2[%c2, %c0_22, %c0_23] : memref<3x32x32xf32, #tpu.memory_space<vmem>>, vector<1x32x32xf32>
    %63 = vector.shape_cast %62 : vector<1x32x32xf32> to vector<32x32xf32>
    %cst_24 = arith.constant dense<0.000000e+00> : vector<8x32xf32>
    %64 = tpu.matmul %60, %63, %cst_24 {dimension_numbers = #tpu.dot_dimension_numbers<[1], [0], [0], [1], [0, 0, 1, 1], [], []>} : vector<8x32xf32>, vector<32x32xf32>, vector<8x32xf32> -> vector<8x32xf32>
    %65 = vector.broadcast %61 : vector<1x32xf32> to vector<8x32xf32>
    %66 = arith.addf %64, %65 : vector<8x32xf32>
    %c0_25 = arith.constant 0 : index
    %c0_26 = arith.constant 0 : index
    %c0_27 = arith.constant 0 : index
    %67 = vector.load %arg4[%c0_25, %c0_26, %c0_27] : memref<1x8x32xf32, #tpu.memory_space<vmem>>, vector<1x8x32xf32>
    %68 = vector.shape_cast %67 : vector<1x8x32xf32> to vector<8x32xf32>
    %69 = vector.shape_cast %66 : vector<8x32xf32> to vector<1x8x32xf32>
    tpu.vector_store %arg4[%c0_25, %c0_26, %c0_27], %69 {strides = array<i32>} : memref<1x8x32xf32, #tpu.memory_space<vmem>>, vector<1x8x32xf32>,
    return
  }
  func.func @transform_0(%arg0: i32) -> (i32, i32, i32) {
    %c0_i32 = arith.constant 0 : i32
    %c0_i32_0 = arith.constant 0 : i32
    %c0_i32_1 = arith.constant 0 : i32
    return %arg0, %c0_i32, %c0_i32_0 : i32, i32, i32
  }
  func.func @transform_1(%arg0: i32) -> (i32, i32, i32) {
    %c0_i32 = arith.constant 0 : i32
    %c0_i32_0 = arith.constant 0 : i32
    %c0_i32_1 = arith.constant 0 : i32
    %c0_i32_2 = arith.constant 0 : i32
    return %c0_i32, %c0_i32_0, %c0_i32_1 : i32, i32, i32
  }
  func.func @transform_2(%arg0: i32) -> (i32, i32) {
    %c0_i32 = arith.constant 0 : i32
    %c0_i32_0 = arith.constant 0 : i32
    %c0_i32_1 = arith.constant 0 : i32
    return %c0_i32, %c0_i32_0 : i32, i32
  }
  func.func @transform_3(%arg0: i32) -> (i32, i32, i32) {
    %c0_i32 = arith.constant 0 : i32
    %c0_i32_0 = arith.constant 0 : i32
    %c0_i32_1 = arith.constant 0 : i32
    return %arg0, %c0_i32, %c0_i32_0 : i32, i32, i32
  }
}

</mosaic_0001>

<llo_original>
// kernel: hamiltonian_nn_forward.1
$region0: #{hamiltonian_nn_forward.1}
  #allocation0 [shape = 'u32[]', space=smem, size = 0x4, offset = 0x4, fixed_abs, tag = 'smem constant byte address 0x4 - core index']
  #allocation1 [shape = 'u32[144,128]{1,0:T(1,128)}', space=vmem, size = 0x12000, scoped, tag = 'internal scratch']
  %s0 = inlined_call_operand.vmem [shape: f32[1,8,32], index: 0, kind: input, shape index: {}]
  %s1 = inlined_call_operand.hbm [shape: f32[3,32,32], index: 1, kind: input, shape index: {}]
  %s2 = inlined_call_operand.vmem [shape: f32[5,32], index: 2, kind: input, shape index: {}]
  %s3 = inlined_call_operand.vmem [shape: f32[1,8,32], index: 3, kind: output, shape index: {}]
  %s4 = sld [smem:[#allocation0]]
  $region26: #{hamiltonian_nn_forward.1} parent=0
    _
  %s6 = ssub.s32 1, %s4
  %s7 = scalar_select 0, %s6, %s4
  $region1: #{hamiltonian_nn_forward.1} parent=0
    #allocation2 [shape = 'u8[49152]{0}', space=vmem, size = 0xc000, scoped, tag = 'input window, operand 1, single buffered']
    #allocation3 [shape = 's32[1]{0}', space=sflag, size = 0x4, scoped, tag = 'scoped memory for hamiltonian_nn_forward.1']
    %8 = vsyncpa [#allocation3], 0
    // Predicated region
    $region2: #{hamiltonian_nn_forward.1} parent=1 // pred_check
      _
    $region3: #{hamiltonian_nn_forward.1} parent=1 // pred_check_branch
      %10 = sbr.rel (0) target = $region5
    $region4: #{hamiltonian_nn_forward.1} parent=1 // pred_region
      _
    $region5: #{hamiltonian_nn_forward.1} parent=1 // pred_fallthru
      _
    // Predicated region
    $region6: #{hamiltonian_nn_forward.1} parent=1 // pred_check
      _
    $region7: #{hamiltonian_nn_forward.1} parent=1 // pred_check_branch
      %12 = sbr.rel (0) target = $region9
    $region8: #{hamiltonian_nn_forward.1} parent=1 // pred_region
      %s14 = ssub.s32 1536, 1536
      %15 = vsyncadd [#allocation3], %s14
      %s16 = sshll.u32 [#allocation2], 4
      %s17 = int_to_ptr.vmem [resolvable:$true] %s16
      %22 = dma.hbm_to_vmem [thread:$0]  %s1, 1536, %s17, [#allocation3], 128, 128, 8
    $region9: #{hamiltonian_nn_forward.1} parent=1 // pred_fallthru
      _
    // Predicated region
    $region10: #{hamiltonian_nn_forward.1} parent=1 // pred_check
      _
    $region11: #{hamiltonian_nn_forward.1} parent=1 // pred_check_branch
      %24 = sbr.rel (0) target = $region13
    $region12: #{hamiltonian_nn_forward.1} parent=1 // pred_region
      _
    $region13: #{hamiltonian_nn_forward.1} parent=1 // pred_fallthru
      _
    // Predicated region
    $region14: #{hamiltonian_nn_forward.1} parent=1 // pred_check
      _
    $region15: #{hamiltonian_nn_forward.1} parent=1 // pred_check_branch
      %26 = sbr.rel (0) target = $region17
    $region16: #{hamiltonian_nn_forward.1} parent=1 // pred_region
      %27 = dma.done [#allocation3], 1536
    $region17: #{hamiltonian_nn_forward.1} parent=1 // pred_fallthru
      _
    %v28 = vld [vmem:[%s2] sm:$0x1f]
    %v29 = vld [vmem:[%s0] sm:$0xff]
    %v30 = vld [vmem:[#allocation2] sm:$0xff]
    %v31 = vld [vmem:[#allocation2 + $0x8] sm:$0xff]
    %v32 = vld [vmem:[#allocation2 + $0x10] sm:$0xff]
    %v33 = vld [vmem:[#allocation2 + $0x18] sm:$0xff]
    %vm34 = vcmask 261120
    %v36 = vsel %vm34, %v29, 0
    %38 = vmatprep.subr.mxu0 0.0
    %39 = vmatpush1.msra.mxu0 %v30
    %40 = vmatprep.subr.mxu0 0.0
    %41 = vmatpush1.msra.mxu0 %v31
    %42 = vmatprep.subr.mxu0 0.0
    %43 = vmatpush1.msra.mxu0 %v32
    %44 = vmatprep.subr.mxu0 0.0
    %45 = vmatpush1.msra.mxu0 %v33
    %46 = vmatprep.subr.mxu0 0.0
    %47 = vmatpush1.msra.mxu0 0.0
    %48 = vmatprep.subr.mxu0 0.0
    %49 = vmatpush1.msra.mxu0 0.0
    %50 = vmatprep.subr.mxu0 0.0
    %51 = vmatpush1.msra.mxu0 0.0
    %52 = vmatprep.subr.mxu0 0.0
    %53 = vmatpush1.msra.mxu0 0.0
    %54 = vmatprep.subr.mxu0 0.0
    %55 = vmatpush1.msra.mxu0 0.0
    %56 = vmatprep.subr.mxu0 0.0
    %57 = vmatpush1.msra.mxu0 0.0
    %58 = vmatprep.subr.mxu0 0.0
    %59 = vmatpush1.msra.mxu0 0.0
    %60 = vmatprep.subr.mxu0 0.0
    %61 = vmatpush1.msra.mxu0 0.0
    %62 = vmatprep.subr.mxu0 0.0
    %63 = vmatpush1.msra.mxu0 0.0
    %64 = vmatprep.subr.mxu0 0.0
    %65 = vmatpush1.msra.mxu0 0.0
    %66 = vmatprep.subr.mxu0 0.0
    %67 = vmatpush1.msra.mxu0 0.0
    %68 = vmatprep.subr.mxu0 0.0
    %69 = vmatpush1.msra.mxu0 0.0
    %70 = vmatprep.subr.mxu0 0.0
    %71 = vmatpush1.msra.mxu0 0.0
    %72 = vmatprep.subr.mxu0 0.0
    %73 = vmatpush1.msra.mxu0 0.0
    %74 = vmatprep.subr.mxu0 0.0
    %75 = vmatpush1.msra.mxu0 0.0
    %76 = vmatprep.subr.mxu0 0.0
    %77 = vmatpush1.msra.mxu0 0.0
    %78 = vmatprep.subr.mxu0 0.0
    %79 = vmatpush1.msra.mxu0 0.0
    %80 = vmatprep.subr.mxu0 0.0
    %81 = vmatpush1.msra.mxu0 0.0
    %82 = vmatprep.subr.mxu0 0.0
    %83 = vmatpush1.msra.mxu0 0.0
    %84 = vmatprep.subr.mxu0 0.0
    %85 = vmatpush1.msra.mxu0 0.0
    %86 = vmatprep.subr.mxu0 0.0
    %87 = vmatpush1.msra.mxu0 0.0
    %88 = vmatprep.subr.mxu0 0.0
    %89 = vmatpush1.msra.mxu0 0.0
    %90 = vmatprep.subr.mxu0 0.0
    %91 = vmatpush1.msra.mxu0 0.0
    %92 = vmatprep.subr.mxu0 0.0
    %93 = vmatpush1.msra.mxu0 0.0
    %94 = vmatprep.subr.mxu0 0.0
    %95 = vmatpush1.msra.mxu0 0.0
    %96 = vmatprep.subr.mxu0 0.0
    %97 = vmatpush1.msra.mxu0 0.0
    %98 = vmatprep.subr.mxu0 0.0
    %99 = vmatpush1.msra.mxu0 0.0
    %100 = vmatprep.subr.mxu0 0.0
    %101 = vmatpush1.msra.mxu0 0.0
    %102 = vmatprep.mubr.f32.mxu0 0.0
    %103 = vmatmul.mubr.f32.gmra.mrb[0].mxu0 %v36
    %v104 = vpop.f32.mrb[0].mxu0
    %v105 = vadd.f32 0.0, %v104
    %v106 = vpop.f32.mrb[0].mxu0
    %107 = vdwg.mxu0
    %v108 = vsel %vm34, %v105, 0.0
    %v109 = vrot.slane %v108, 4
    %v110 = vadd.f32 %v108, %v109
    %v111 = vrot.slane %v110, 2
    %v112 = vadd.f32 %v110, %v111
    %v113 = vrot.slane %v112, 1
    %v114 = vadd.f32 %v112, %v113
    %v115 = vmul.f32 %v105, %v105
    %v116 = vsel %vm34, %v115, 0.0
    %v117 = vrot.slane %v116, 4
    %v118 = vadd.f32 %v116, %v117
    %v119 = vrot.slane %v118, 2
    %v120 = vadd.f32 %v118, %v119
    %v121 = vrot.slane %v120, 1
    %v122 = vadd.f32 %v120, %v121
    %v123 = vmul.f32 %v114, 0.125
    %v124 = vmul.f32 %v122, 0.125
    %v125 = vmul.f32 %v123, %v123
    %v126 = vsub.f32 %v124, %v125
    %v127 = vmax.f32 %v126, 0.0
    %v128 = vadd.f32 %v127, 1e-05
    %v129 = vrsqrt.pop %v128
    %v130 = vmul.f32 %v28, %v129
    %v131 = vmul.f32 %v123, %v130
    %v133 = vrot.slane %v131, 7
    %v135 = vsub.f32 %v28, %v133
    %v136 = vlaneseq
    %v137 = vshrl.u32 %v136, 7
    %v138 = vsub.s32 0, %v137
    %v139 = vrot.slane %v130, %v138
    %v140 = vmul.f32 %v105, %v139
    %v141 = vlaneseq
    %v142 = vshrl.u32 %v141, 7
    %v143 = vsub.s32 1, %v142
    %v144 = vrot.slane %v135, %v143
    %v145 = vadd.f32 %v140, %v144
    %v146 = vtanh.pop %v145
    %s147 = scalar_lea.vmem [#allocation2], 32
    %v148 = vld [vmem:[%s147] sm:$0xff]
    %v149 = vld [vmem:[%s147 + $0x8] sm:$0xff]
    %v150 = vld [vmem:[%s147 + $0x10] sm:$0xff]
    %v151 = vld [vmem:[%s147 + $0x18] sm:$0xff]
    %v153 = vsel %vm34, %v146, 0
    %155 = vmatprep.subr.mxu0 0.0
    %156 = vmatpush1.msra.mxu0 %v148
    %157 = vmatprep.subr.mxu0 0.0
    %158 = vmatpush1.msra.mxu0 %v149
    %159 = vmatprep.subr.mxu0 0.0
    %160 = vmatpush1.msra.mxu0 %v150
    %161 = vmatprep.subr.mxu0 0.0
    %162 = vmatpush1.msra.mxu0 %v151
    %163 = vmatprep.subr.mxu0 0.0
    %164 = vmatpush1.msra.mxu0 0.0
    %165 = vmatprep.subr.mxu0 0.0
    %166 = vmatpush1.msra.mxu0 0.0
    %167 = vmatprep.subr.mxu0 0.0
    %168 = vmatpush1.msra.mxu0 0.0
    %169 = vmatprep.subr.mxu0 0.0
    %170 = vmatpush1.msra.mxu0 0.0
    %171 = vmatprep.subr.mxu0 0.0
    %172 = vmatpush1.msra.mxu0 0.0
    %173 = vmatprep.subr.mxu0 0.0
    %174 = vmatpush1.msra.mxu0 0.0
    %175 = vmatprep.subr.mxu0 0.0
    %176 = vmatpush1.msra.mxu0 0.0
    %177 = vmatprep.subr.mxu0 0.0
    %178 = vmatpush1.msra.mxu0 0.0
    %179 = vmatprep.subr.mxu0 0.0
    %180 = vmatpush1.msra.mxu0 0.0
    %181 = vmatprep.subr.mxu0 0.0
    %182 = vmatpush1.msra.mxu0 0.0
    %183 = vmatprep.subr.mxu0 0.0
    %184 = vmatpush1.msra.mxu0 0.0
    %185 = vmatprep.subr.mxu0 0.0
    %186 = vmatpush1.msra.mxu0 0.0
    %187 = vmatprep.subr.mxu0 0.0
    %188 = vmatpush1.msra.mxu0 0.0
    %189 = vmatprep.subr.mxu0 0.0
    %190 = vmatpush1.msra.mxu0 0.0
    %191 = vmatprep.subr.mxu0 0.0
    %192 = vmatpush1.msra.mxu0 0.0
    %193 = vmatprep.subr.mxu0 0.0
    %194 = vmatpush1.msra.mxu0 0.0
    %195 = vmatprep.subr.mxu0 0.0
    %196 = vmatpush1.msra.mxu0 0.0
    %197 = vmatprep.subr.mxu0 0.0
    %198 = vmatpush1.msra.mxu0 0.0
    %199 = vmatprep.subr.mxu0 0.0
    %200 = vmatpush1.msra.mxu0 0.0
    %201 = vmatprep.subr.mxu0 0.0
    %202 = vmatpush1.msra.mxu0 0.0
    %203 = vmatprep.subr.mxu0 0.0
    %204 = vmatpush1.msra.mxu0 0.0
    %205 = vmatprep.subr.mxu0 0.0
    %206 = vmatpush1.msra.mxu0 0.0
    %207 = vmatprep.subr.mxu0 0.0
    %208 = vmatpush1.msra.mxu0 0.0
    %209 = vmatprep.subr.mxu0 0.0
    %210 = vmatpush1.msra.mxu0 0.0
    %211 = vmatprep.subr.mxu0 0.0
    %212 = vmatpush1.msra.mxu0 0.0
    %213 = vmatprep.subr.mxu0 0.0
    %214 = vmatpush1.msra.mxu0 0.0
    %215 = vmatprep.subr.mxu0 0.0
    %216 = vmatpush1.msra.mxu0 0.0
    %217 = vmatprep.subr.mxu0 0.0
    %218 = vmatpush1.msra.mxu0 0.0
    %219 = vmatprep.mubr.f32.mxu0 0.0
    %220 = vmatmul.mubr.f32.gmra.mrb[0].mxu0 %v153
    %v221 = vpop.f32.mrb[0].mxu0
    %v222 = vadd.f32 0.0, %v221
    %v223 = vpop.f32.mrb[0].mxu0
    %224 = vdwg.mxu0
    %v225 = vsel %vm34, %v222, 0.0
    %v226 = vrot.slane %v225, 4
    %v227 = vadd.f32 %v225, %v226
    %v228 = vrot.slane %v227, 2
    %v229 = vadd.f32 %v227, %v228
    %v230 = vrot.slane %v229, 1
    %v231 = vadd.f32 %v229, %v230
    %v232 = vmul.f32 %v222, %v222
    %v233 = vsel %vm34, %v232, 0.0
    %v234 = vrot.slane %v233, 4
    %v235 = vadd.f32 %v233, %v234
    %v236 = vrot.slane %v235, 2
    %v237 = vadd.f32 %v235, %v236
    %v238 = vrot.slane %v237, 1
    %v239 = vadd.f32 %v237, %v238
    %v240 = vmul.f32 %v231, 0.125
    %v241 = vmul.f32 %v239, 0.125
    %v242 = vmul.f32 %v240, %v240
    %v243 = vsub.f32 %v241, %v242
    %v244 = vmax.f32 %v243, 0.0
    %v245 = vadd.f32 %v244, 1e-05
    %v246 = vrsqrt.pop %v245
    %v247 = vmul.f32 %v28, %v246
    %v248 = vmul.f32 %v240, %v247
    %v250 = vrot.slane %v248, 7
    %v252 = vsub.f32 %v28, %v250
    %v253 = vlaneseq
    %v254 = vshrl.u32 %v253, 7
    %v255 = vsub.s32 2, %v254
    %v256 = vrot.slane %v247, %v255
    %v257 = vmul.f32 %v222, %v256
    %v258 = vlaneseq
    %v259 = vshrl.u32 %v258, 7
    %v260 = vsub.s32 3, %v259
    %v261 = vrot.slane %v252, %v260
    %v262 = vadd.f32 %v257, %v261
    %v263 = vtanh.pop %v262
    %s264 = scalar_lea.vmem [#allocation2], 64
    %v265 = vld [vmem:[%s264] sm:$0xff]
    %v266 = vld [vmem:[%s264 + $0x8] sm:$0xff]
    %v267 = vld [vmem:[%s264 + $0x10] sm:$0xff]
    %v268 = vld [vmem:[%s264 + $0x18] sm:$0xff]
    %v269 = vlaneseq
    %v270 = vshrl.u32 %v269, 7
    %v271 = vsub.s32 4, %v270
    %v272 = vrot.slane %v28, %v271
    %v274 = vsel %vm34, %v263, 0
    %276 = vmatprep.subr.mxu0 0.0
    %277 = vmatpush1.msra.mxu0 %v265
    %278 = vmatprep.subr.mxu0 0.0
    %279 = vmatpush1.msra.mxu0 %v266
    %280 = vmatprep.subr.mxu0 0.0
    %281 = vmatpush1.msra.mxu0 %v267
    %282 = vmatprep.subr.mxu0 0.0
    %283 = vmatpush1.msra.mxu0 %v268
    %284 = vmatprep.subr.mxu0 0.0
    %285 = vmatpush1.msra.mxu0 0.0
    %286 = vmatprep.subr.mxu0 0.0
    %287 = vmatpush1.msra.mxu0 0.0
    %288 = vmatprep.subr.mxu0 0.0
    %289 = vmatpush1.msra.mxu0 0.0
    %290 = vmatprep.subr.mxu0 0.0
    %291 = vmatpush1.msra.mxu0 0.0
    %292 = vmatprep.subr.mxu0 0.0
    %293 = vmatpush1.msra.mxu0 0.0
    %294 = vmatprep.subr.mxu0 0.0
    %295 = vmatpush1.msra.mxu0 0.0
    %296 = vmatprep.subr.mxu0 0.0
    %297 = vmatpush1.msra.mxu0 0.0
    %298 = vmatprep.subr.mxu0 0.0
    %299 = vmatpush1.msra.mxu0 0.0
    %300 = vmatprep.subr.mxu0 0.0
    %301 = vmatpush1.msra.mxu0 0.0
    %302 = vmatprep.subr.mxu0 0.0
    %303 = vmatpush1.msra.mxu0 0.0
    %304 = vmatprep.subr.mxu0 0.0
    %305 = vmatpush1.msra.mxu0 0.0
    %306 = vmatprep.subr.mxu0 0.0
    %307 = vmatpush1.msra.mxu0 0.0
    %308 = vmatprep.subr.mxu0 0.0
    %309 = vmatpush1.msra.mxu0 0.0
    %310 = vmatprep.subr.mxu0 0.0
    %311 = vmatpush1.msra.mxu0 0.0
    %312 = vmatprep.subr.mxu0 0.0
    %313 = vmatpush1.msra.mxu0 0.0
    %314 = vmatprep.subr.mxu0 0.0
    %315 = vmatpush1.msra.mxu0 0.0
    %316 = vmatprep.subr.mxu0 0.0
    %317 = vmatpush1.msra.mxu0 0.0
    %318 = vmatprep.subr.mxu0 0.0
    %319 = vmatpush1.msra.mxu0 0.0
    %320 = vmatprep.subr.mxu0 0.0
    %321 = vmatpush1.msra.mxu0 0.0
    %322 = vmatprep.subr.mxu0 0.0
    %323 = vmatpush1.msra.mxu0 0.0
    %324 = vmatprep.subr.mxu0 0.0
    %325 = vmatpush1.msra.mxu0 0.0
    %326 = vmatprep.subr.mxu0 0.0
    %327 = vmatpush1.msra.mxu0 0.0
    %328 = vmatprep.subr.mxu0 0.0
    %329 = vmatpush1.msra.mxu0 0.0
    %330 = vmatprep.subr.mxu0 0.0
    %331 = vmatpush1.msra.mxu0 0.0
    %332 = vmatprep.subr.mxu0 0.0
    %333 = vmatpush1.msra.mxu0 0.0
    %334 = vmatprep.subr.mxu0 0.0
    %335 = vmatpush1.msra.mxu0 0.0
    %336 = vmatprep.subr.mxu0 0.0
    %337 = vmatpush1.msra.mxu0 0.0
    %338 = vmatprep.subr.mxu0 0.0
    %339 = vmatpush1.msra.mxu0 0.0
    %340 = vmatprep.mubr.f32.mxu0 0.0
    %341 = vmatmul.mubr.f32.gmra.mrb[0].mxu0 %v274
    %v342 = vpop.f32.mrb[0].mxu0
    %v343 = vadd.f32 %v272, %v342
    %v344 = vpop.f32.mrb[0].mxu0
    %345 = vdwg.mxu0
    %346 = vst.msk [vmem:[%s3] sm:$0xff] %vm34, %v343
    // Predicated region
    $region18: #{hamiltonian_nn_forward.1} parent=1 // pred_check
      _
    $region19: #{hamiltonian_nn_forward.1} parent=1 // pred_check_branch
      %348 = sbr.rel (0) target = $region21
    $region20: #{hamiltonian_nn_forward.1} parent=1 // pred_region
      _
    $region21: #{hamiltonian_nn_forward.1} parent=1 // pred_fallthru
      _
    // Predicated region
    $region22: #{hamiltonian_nn_forward.1} parent=1 // pred_check
      _
    $region23: #{hamiltonian_nn_forward.1} parent=1 // pred_check_branch
      %350 = sbr.rel (0) target = $region25
    $region24: #{hamiltonian_nn_forward.1} parent=1 // pred_region
      _
    $region25: #{hamiltonian_nn_forward.1} parent=1 // pred_fallthru
      _
    %351 = vsyncpa [#allocation3], 1

</llo_original>
